<compile_context>
chip_gen: v7x
topology: tpu7x:2x2x1
jax: 0.10.0
libtpu: 0.0.40
codegen_flags: <defaults>
</compile_context>

<pallas_src>
import functools

import jax
import jax.numpy as jnp
from jax.experimental import pallas as pl
from jax.experimental.pallas import tpu as pltpu


def se_kernel(x_ref, w1_ref, w2_ref, o_ref, *, inv_s, b_tile):
    """x_ref/o_ref: (b_tile, C, S_pad). w1_ref: (H, C). w2_ref: (C, H)."""
    w1 = w1_ref[...]                       # (H, C)  == fc1.weight (PyTorch layout)
    w2 = w2_ref[...]                       # (C, H)  == fc2.weight
    for i in range(b_tile):                # tiny static loop over the batch tile
        xi = x_ref[i]                                                  # (C, S_pad)
        # Global average pool: zero padding contributes nothing to the sum;
        # divide by the true spatial size.
        p = jnp.sum(xi.astype(jnp.float32), axis=-1, keepdims=True) * inv_s  # (C, 1)
        h = jnp.dot(w1, p, preferred_element_type=jnp.float32)        # (H, 1)
        h = jnp.maximum(h, 0.0)                                        # ReLU
        y = jnp.dot(w2, h, preferred_element_type=jnp.float32)        # (C, 1)
        y = jax.nn.sigmoid(y)                                          # Sigmoid
        # Broadcast-multiply along lanes; scale stays a column -> no relayout.
        o_ref[i] = (xi * y).astype(o_ref.dtype)                        # (C, S_pad)


def se_layer(x, fc1_w, fc2_w):
    """x: (B, C, D, H, W). fc1_w: (C//r, C), fc2_w: (C, C//r) (PyTorch shapes)."""
    b, c, d, h, w = x.shape
    hid = fc1_w.shape[0]
    s = d * h * w
    itemsize = jnp.dtype(x.dtype).itemsize

    # Lane-dense spatial: pad S up to a multiple of 128 (stripped afterwards).
    s_pad = pl.cdiv(s, 128) * 128
    x_flat = x.reshape(b, c, s)
    if s_pad != s:
        x_flat = jnp.pad(x_flat, ((0, 0), (0, 0), (0, s_pad - s)))

    # Batch tile: biggest that keeps double-buffered in+out blocks inside a
    # v7x-safe VMEM budget, while leaving >= 2 grid steps (megacore sharding).
    per_batch_bytes = c * s_pad * itemsize
    block_budget = 8 * 1024 * 1024          # per x-block (~4x with in+out double-buffering)
    b_tile = max(1, min(b, block_budget // max(per_batch_bytes, 1)))
    if b >= 2:
        b_tile = min(b_tile, (b + 1) // 2)  # keep at least 2 grid steps
    while b % b_tile != 0:                  # keep the grid exact
        b_tile -= 1

    block_bytes = b_tile * per_batch_bytes
    w_bytes = 2 * hid * c * 4
    vmem_limit = 4 * block_bytes + 4 * w_bytes + (4 << 20)
    vmem_limit = int(min(100 << 20, max(32 << 20, vmem_limit)))

    kernel = functools.partial(se_kernel, inv_s=float(1.0 / s), b_tile=b_tile)

    out_flat = pl.pallas_call(
        kernel,
        out_shape=jax.ShapeDtypeStruct((b, c, s_pad), x.dtype),
        grid_spec=pltpu.PrefetchScalarGridSpec(
            num_scalar_prefetch=0,
            grid=(b // b_tile,),
            in_specs=[
                pl.BlockSpec((b_tile, c, s_pad), lambda i: (i, 0, 0)),  # x tile
                pl.BlockSpec((hid, c), lambda i: (0, 0)),               # fc1.weight
                pl.BlockSpec((c, hid), lambda i: (0, 0)),               # fc2.weight
            ],
            out_specs=pl.BlockSpec((b_tile, c, s_pad), lambda i: (i, 0, 0)),
        ),
        compiler_params=pltpu.CompilerParams(
            dimension_semantics=("parallel",),
            vmem_limit_bytes=vmem_limit,
        ),
    )(x_flat, fc1_w, fc2_w)

    if s_pad != s:
        out_flat = out_flat[:, :, :s]
    return out_flat.reshape(b, c, d, h, w)


def se_layer_ref(x, fc1_w, fc2_w):
    """Pure-JAX reference matching the PyTorch forward (bias=False linears)."""
    b, c = x.shape[0], x.shape[1]
    y = jnp.mean(x, axis=(2, 3, 4))                      # (B, C)  AdaptiveAvgPool3d(1)
    y = jnp.maximum(y @ fc1_w.T, 0.0)                    # Linear(C, C//r) + ReLU
    y = jax.nn.sigmoid(y @ fc2_w.T)                      # Linear(C//r, C) + Sigmoid
    return x * y.reshape(b, c, 1, 1, 1)


if __name__ == "__main__":
    key = jax.random.PRNGKey(0)
    reduction = 16

    # Case 1: S = D*H*W already a multiple of 128.
    B, C, D, H, W = 2, 32, 4, 8, 8          # channel=32 -> hidden=2
    Hc = C // reduction
    k_x, k_w1, k_w2, k_x2 = jax.random.split(key, 4)
    x = jax.random.normal(k_x, (B, C, D, H, W), dtype=jnp.float32)
    # PyTorch Linear weight shapes (out, in), no bias -- consumed untransposed.
    fc1_w = jax.random.normal(k_w1, (Hc, C), dtype=jnp.float32) * 0.1   # (C//r, C)
    fc2_w = jax.random.normal(k_w2, (C, Hc), dtype=jnp.float32) * 0.1   # (C, C//r)

    out = jax.block_until_ready(se_layer(x, fc1_w, fc2_w))
    ref = se_layer_ref(x, fc1_w, fc2_w)
    assert jnp.allclose(out, ref, atol=1e-5, rtol=1e-5), "mismatch vs reference (case 1)"

    # Case 2: S not a multiple of 128 -> exercises the lane-padding path.
    D2, H2, W2 = 3, 7, 7
    x2 = jax.random.normal(k_x2, (B, C, D2, H2, W2), dtype=jnp.float32)
    out2 = jax.block_until_ready(se_layer(x2, fc1_w, fc2_w))
    ref2 = se_layer_ref(x2, fc1_w, fc2_w)
    assert jnp.allclose(out2, ref2, atol=1e-5, rtol=1e-5), "mismatch vs reference (case 2)"

    print("KERNEL_OK")
</pallas_src>

<mosaic_0001>
module attributes {stable_mosaic.version = 11 : i64} {
  func.func @se_kernel(%arg0: i32, %arg1: memref<1x32x256xf32, #tpu.memory_space<vmem>>, %arg2: memref<2x32xf32, #tpu.memory_space<vmem>>, %arg3: memref<32x2xf32, #tpu.memory_space<vmem>>, %arg4: memref<1x32x256xf32, #tpu.memory_space<vmem>>) attributes {dimension_semantics = [#tpu.dimension_semantics<parallel>], iteration_bounds = array<i64: 2>, scalar_prefetch = 0 : i64, scratch_operands = 0 : i64, tpu.core_type = #tpu.core_type<tc>, window_params = [{transform_indices = @transform_0, window_bounds = array<i64: 1, 32, 256>}, {pipeline_mode = #tpu.pipeline_mode<synchronous>, transform_indices = @transform_1, window_bounds = array<i64: 2, 32>}, {pipeline_mode = #tpu.pipeline_mode<synchronous>, transform_indices = @transform_2, window_bounds = array<i64: 32, 2>}, {transform_indices = @transform_3, window_bounds = array<i64: 1, 32, 256>}]} {
    %c0 = arith.constant 0 : index
    %c0_0 = arith.constant 0 : index
    %0 = vector.load %arg2[%c0, %c0_0] : memref<2x32xf32, #tpu.memory_space<vmem>>, vector<2x32xf32>
    %c0_1 = arith.constant 0 : index
    %c0_2 = arith.constant 0 : index
    %1 = vector.load %arg3[%c0_1, %c0_2] : memref<32x2xf32, #tpu.memory_space<vmem>>, vector<32x2xf32>
    %c0_3 = arith.constant 0 : index
    %c0_4 = arith.constant 0 : index
    %c0_5 = arith.constant 0 : index
    %2 = vector.load %arg1[%c0_3, %c0_4, %c0_5] : memref<1x32x256xf32, #tpu.memory_space<vmem>>, vector<1x32x256xf32>
    %3 = vector.shape_cast %2 : vector<1x32x256xf32> to vector<32x256xf32>
    %cst = arith.constant dense<0.000000e+00> : vector<32xf32>
    %4 = vector.multi_reduction <add>, %3, %cst [1] : vector<32x256xf32> to vector<32xf32>
    %5 = vector.shape_cast %4 : vector<32xf32> to vector<32x1xf32>
    %cst_6 = arith.constant 3.906250e-03 : f32
    %6 = vector.broadcast %cst_6 : f32 to vector<32x1xf32>
    %7 = arith.mulf %5, %6 : vector<32x1xf32>
    %cst_7 = arith.constant dense<0.000000e+00> : vector<2x1xf32>
    %8 = tpu.matmul %0, %7, %cst_7 {dimension_numbers = #tpu.dot_dimension_numbers<[1], [0], [0], [1], [0, 0, 1, 1], [], []>} : vector<2x32xf32>, vector<32x1xf32>, vector<2x1xf32> -> vector<2x1xf32>
    %cst_8 = arith.constant 0.000000e+00 : f32
    %9 = vector.broadcast %cst_8 : f32 to vector<2x1xf32>
    %10 = arith.maximumf %8, %9 : vector<2x1xf32>
    %cst_9 = arith.constant dense<0.000000e+00> : vector<32x1xf32>
    %11 = tpu.matmul %1, %10, %cst_9 {dimension_numbers = #tpu.dot_dimension_numbers<[1], [0], [0], [1], [0, 0, 1, 1], [], []>} : vector<32x2xf32>, vector<2x1xf32>, vector<32x1xf32> -> vector<32x1xf32>
    %12 = arith.negf %11 : vector<32x1xf32>
    %13 = math.exp %12 : vector<32x1xf32>
    %cst_10 = arith.constant 1.000000e+00 : f32
    %14 = vector.broadcast %cst_10 : f32 to vector<32x1xf32>
    %15 = arith.addf %14, %13 : vector<32x1xf32>
    %16 = arith.divf %14, %15 : vector<32x1xf32>
    %17 = vector.broadcast %16 : vector<32x1xf32> to vector<32x256xf32>
    %18 = arith.mulf %3, %17 : vector<32x256xf32>
    %c0_11 = arith.constant 0 : index
    %c0_12 = arith.constant 0 : index
    %c0_13 = arith.constant 0 : index
    %19 = vector.load %arg4[%c0_11, %c0_12, %c0_13] : memref<1x32x256xf32, #tpu.memory_space<vmem>>, vector<1x32x256xf32>
    %20 = vector.shape_cast %19 : vector<1x32x256xf32> to vector<32x256xf32>
    %21 = vector.shape_cast %18 : vector<32x256xf32> to vector<1x32x256xf32>
    tpu.vector_store %arg4[%c0_11, %c0_12, %c0_13], %21 {strides = array<i32>} : memref<1x32x256xf32, #tpu.memory_space<vmem>>, vector<1x32x256xf32>,
    return
  }
  func.func @transform_0(%arg0: i32) -> (i32, i32, i32) {
    %c0_i32 = arith.constant 0 : i32
    %c0_i32_0 = arith.constant 0 : i32
    %c0_i32_1 = arith.constant 0 : i32
    return %arg0, %c0_i32, %c0_i32_0 : i32, i32, i32
  }
  func.func @transform_1(%arg0: i32) -> (i32, i32) {
    %c0_i32 = arith.constant 0 : i32
    %c0_i32_0 = arith.constant 0 : i32
    %c0_i32_1 = arith.constant 0 : i32
    return %c0_i32, %c0_i32_0 : i32, i32
  }
  func.func @transform_2(%arg0: i32) -> (i32, i32) {
    %c0_i32 = arith.constant 0 : i32
    %c0_i32_0 = arith.constant 0 : i32
    %c0_i32_1 = arith.constant 0 : i32
    return %c0_i32, %c0_i32_0 : i32, i32
  }
  func.func @transform_3(%arg0: i32) -> (i32, i32, i32) {
    %c0_i32 = arith.constant 0 : i32
    %c0_i32_0 = arith.constant 0 : i32
    %c0_i32_1 = arith.constant 0 : i32
    return %arg0, %c0_i32, %c0_i32_0 : i32, i32, i32
  }
}

</mosaic_0001>

<llo_original>
// kernel: tpu_custom_call.1
$region0: #{tpu_custom_call.1}
  #allocation0 [shape = 'u32[]', space=smem, size = 0x4, offset = 0x4, fixed_abs, tag = 'smem constant byte address 0x4 - core index']
  #allocation1 [shape = 'u32[144,128]{1,0:T(1,128)}', space=vmem, size = 0x12000, scoped, tag = 'internal scratch']
  %s0 = inlined_call_operand.hbm [shape: f32[2,32,256], index: 0, kind: input, shape index: {}]
  %s1 = inlined_call_operand.vmem [shape: f32[2,32], index: 1, kind: input, shape index: {}]
  %s2 = inlined_call_operand.vmem [shape: f32[32,2], index: 2, kind: input, shape index: {}]
  %s3 = inlined_call_operand.hbm [shape: f32[2,32,256], index: 3, kind: output, shape index: {}]
  %s4 = sld [smem:[#allocation0]]
  $region49: #{tpu_custom_call.1} parent=0
    _
  %s6 = ssub.s32 1, %s4
  %s7 = scalar_select 0, %s6, %s4
  $region1: #{tpu_custom_call.1} parent=0
    #allocation2 [shape = 'u8[65536]{0}', space=vmem, size = 0x10000, scoped, tag = 'input window, operand 0']
    #allocation3 [shape = 's32[2]{0}', space=sflag, size = 0x8, scoped, tag = 'scoped memory for tpu_custom_call.1']
    #allocation4 [shape = 's32[2]{0}', space=sflag, size = 0x8, scoped, tag = 'scoped memory for tpu_custom_call.1']
    #allocation5 [shape = 'u8[65536]{0}', space=vmem, size = 0x10000, scoped, tag = 'output window, operand 0']
    %8 = vsyncpa [#allocation3], 0
    %s9 = scalar_lea.sflag [#allocation3], 1
    %10 = vsyncpa %s9, 0
    %11 = vsyncpa [#allocation4], 0
    %s12 = scalar_lea.sflag [#allocation4], 1
    %13 = vsyncpa %s12, 0
    loop: start=0, step=1, limit=4
    $region2: #{tpu_custom_call.1} parent=1 // loop_pre_header
      _
    $region3: #{tpu_custom_call.1} parent=1 // loop_header
      %s15 = sphi 0, %s19
      %p16 = scmp.ge.s32.totalorder %s15, 4
      %s25 = sphi 0, %s27
      %s28 = sphi 0, %s25
      %s29 = sphi 0, %s28
      %s45 = sphi 0, %s29
      %s49 = sphi 0, %s49
      %s51 = sphi 0, %s49
      %s52 = sphi 0, %s51
      %s66 = sphi 0, %s52
      %s70 = sphi 0, %s70
      %s72 = sphi 0, %s70
      %s73 = sphi 0, %s72
      %s87 = sphi 0, %s73
      %s93 = sphi 0, %s95
      %s96 = sphi 0, %s93
      %s97 = sphi 0, %s96
      %s113 = sphi 0, %s97
    $region4: #{tpu_custom_call.1} parent=1 // loop_header_branch
      %18 = sbr.rel (%p16) target = $region8
    $region5: #{tpu_custom_call.1} parent=1 // loop_body
      %s20 = ssub.s32 %s15, 1
      %s21 = ssub.s32 %s15, 2
      %s22 = sadd.s32 %s15, 1
      %s23 = ssub.s32 %s15, %s22
      %p24 = scmp.eq.s32.totalorder %s23, 0
      %s26 = sadd.s32 %s25, 1
      %s27 = scalar_select %p24, %s25, %s26
      %p30 = pneg %p24
      %p31 = scmp.eq.s32.totalorder %s15, 1
      %p32 = por %p30, %p31
      %p33 = scmp.ne.s32.totalorder %s25, %s28
      %p34 = scmp.eq.s32.totalorder %s15, 0
      %p35 = por %p33, %p34
      %p36 = scmp.ne.s32.totalorder %s25, %s28
      %p37 = scmp.eq.s32.totalorder %s20, 1
      %p38 = por %p36, %p37
      %p39 = scmp.ne.s32.totalorder %s28, %s29
      %p40 = scmp.eq.s32.totalorder %s20, 0
      %p41 = por %p39, %p40
      %p42 = scmp.ne.s32.totalorder %s28, %s29
      %p43 = scmp.eq.s32.totalorder %s21, 1
      %p44 = por %p42, %p43
      %p46 = scmp.ne.s32.totalorder %s29, %s45
      %p47 = scmp.eq.s32.totalorder %s21, 0
      %p48 = por %p46, %p47
      %s50 = sadd.s32 %s49, 1
      %p53 = scmp.eq.s32.totalorder %s15, 1
      %p54 = scmp.ne.s32.totalorder %s49, %s51
      %p55 = scmp.eq.s32.totalorder %s15, 0
      %p56 = por %p54, %p55
      %p57 = scmp.ne.s32.totalorder %s49, %s51
      %p58 = scmp.eq.s32.totalorder %s20, 1
      %p59 = por %p57, %p58
      %p60 = scmp.ne.s32.totalorder %s51, %s52
      %p61 = scmp.eq.s32.totalorder %s20, 0
      %p62 = por %p60, %p61
      %p63 = scmp.ne.s32.totalorder %s51, %s52
      %p64 = scmp.eq.s32.totalorder %s21, 1
      %p65 = por %p63, %p64
      %p67 = scmp.ne.s32.totalorder %s52, %s66
      %p68 = scmp.eq.s32.totalorder %s21, 0
      %p69 = por %p67, %p68
      %s71 = sadd.s32 %s70, 1
      %p74 = scmp.eq.s32.totalorder %s15, 1
      %p75 = scmp.ne.s32.totalorder %s70, %s72
      %p76 = scmp.eq.s32.totalorder %s15, 0
      %p77 = por %p75, %p76
      %p78 = scmp.ne.s32.totalorder %s70, %s72
      %p79 = scmp.eq.s32.totalorder %s20, 1
      %p80 = por %p78, %p79
      %p81 = scmp.ne.s32.totalorder %s72, %s73
      %p82 = scmp.eq.s32.totalorder %s20, 0
      %p83 = por %p81, %p82
      %p84 = scmp.ne.s32.totalorder %s72, %s73
      %p85 = scmp.eq.s32.totalorder %s21, 1
      %p86 = por %p84, %p85
      %p88 = scmp.ne.s32.totalorder %s73, %s87
      %p89 = scmp.eq.s32.totalorder %s21, 0
      %p90 = por %p88, %p89
      %s91 = ssub.s32 %s15, %s22
      %p92 = scmp.eq.s32.totalorder %s91, 0
      %s94 = sadd.s32 %s93, 1
      %s95 = scalar_select %p92, %s93, %s94
      %p98 = pneg %p92
      %p99 = scmp.eq.s32.totalorder %s15, 1
      %p100 = por %p98, %p99
      %p101 = scmp.ne.s32.totalorder %s93, %s96
      %p102 = scmp.eq.s32.totalorder %s15, 0
      %p103 = por %p101, %p102
      %p104 = scmp.ne.s32.totalorder %s93, %s96
      %p105 = scmp.eq.s32.totalorder %s20, 1
      %p106 = por %p104, %p105
      %p107 = scmp.ne.s32.totalorder %s96, %s97
      %p108 = scmp.eq.s32.totalorder %s20, 0
      %p109 = por %p107, %p108
      %p110 = scmp.ne.s32.totalorder %s96, %s97
      %p111 = scmp.eq.s32.totalorder %s21, 1
      %p112 = por %p110, %p111
      %p114 = scmp.ne.s32.totalorder %s97, %s113
      %p115 = scmp.eq.s32.totalorder %s21, 0
      %p116 = por %p114, %p115
      %p117 = scmp.le.s32.totalorder 1, %s15
      %p118 = scmp.lt.s32.totalorder %s15, 3
      %p119 = pnand %p117, %p118
      %p120 = pneg %p119
      // Predicated region
      $region9: #{tpu_custom_call.1} parent=5 // pred_check
        _
      $region10: #{tpu_custom_call.1} parent=5 // pred_check_branch
        %122 = sbr.rel (%p119) target = $region12
      $region11: #{tpu_custom_call.1} parent=5 // pred_region
        %s123 = ssub.s32 %s15, 1
        // Predicated region
        $region13: #{tpu_custom_call.1} parent=11 // pred_check
          %p124 = pneg %p62
        $region14: #{tpu_custom_call.1} parent=11 // pred_check_branch
          %126 = sbr.rel (%p124) target = $region16
        $region15: #{tpu_custom_call.1} parent=11 // pred_region
          _
        $region16: #{tpu_custom_call.1} parent=11 // pred_fallthru
          _
        // Predicated region
        $region17: #{tpu_custom_call.1} parent=11 // pred_check
          %p127 = pneg %p83
        $region18: #{tpu_custom_call.1} parent=11 // pred_check_branch
          %129 = sbr.rel (%p127) target = $region20
        $region19: #{tpu_custom_call.1} parent=11 // pred_region
          _
        $region20: #{tpu_custom_call.1} parent=11 // pred_fallthru
          _
      $region12: #{tpu_custom_call.1} parent=5 // pred_fallthru
        _
      %p130 = scmp.lt.s32.totalorder %s15, 2
      // Predicated region
      $region21: #{tpu_custom_call.1} parent=5 // pred_check
        %p131 = pneg %p130
      $region22: #{tpu_custom_call.1} parent=5 // pred_check_branch
        %133 = sbr.rel (%p131) target = $region24
      $region23: #{tpu_custom_call.1} parent=5 // pred_region
        // Predicated region
        $region25: #{tpu_custom_call.1} parent=23 // pred_check
          %p134 = pneg %p35
        $region26: #{tpu_custom_call.1} parent=23 // pred_check_branch
          %136 = sbr.rel (%p134) target = $region28
        $region27: #{tpu_custom_call.1} parent=23 // pred_region
          %s137 = sand.u32 %s25, 1
          %s138 = scalar_lea.sflag [#allocation3], %s137
          %s139 = sand.u32 %s25, 1
          %s140 = smul.addr %s139, 64
          %s141 = scalar_lea.vmem [#allocation2], %s140
          %s143 = ssub.s32 1024, 1024
          %144 = vsyncadd %s138, %s143
          %s145 = smul.addr %s15, 8
          %s146 = smul.addr %s145, 128
          %s147 = scalar_lea.hbm %s0, %s146
          %s148 = sshll.u32 %s141, 4
          %s149 = int_to_ptr.vmem [resolvable:$true] %s148
          %154 = dma.hbm_to_vmem [thread:$0]  %s147, 1024, %s149, %s138, 256, 256, 16
        $region28: #{tpu_custom_call.1} parent=23 // pred_fallthru
          _
      $region24: #{tpu_custom_call.1} parent=5 // pred_fallthru
        _
      %p155 = scmp.le.s32.totalorder 1, %s15
      %p156 = scmp.lt.s32.totalorder %s15, 3
      %p157 = pnand %p155, %p156
      %p158 = pneg %p157
      // Predicated region
      $region29: #{tpu_custom_call.1} parent=5 // pred_check
        _
      $region30: #{tpu_custom_call.1} parent=5 // pred_check_branch
        %160 = sbr.rel (%p157) target = $region32
      $region31: #{tpu_custom_call.1} parent=5 // pred_region
        %s161 = ssub.s32 %s15, 1
        %s162 = sand.u32 %s28, 1
        %s163 = scalar_lea.sflag [#allocation3], %s162
        %s164 = sand.u32 %s28, 1
        %s165 = smul.addr %s164, 64
        %s166 = scalar_lea.vmem [#allocation2], %s165
        // Predicated region
        $region33: #{tpu_custom_call.1} parent=31 // pred_check
          %p167 = pneg %p41
        $region34: #{tpu_custom_call.1} parent=31 // pred_check_branch
          %169 = sbr.rel (%p167) target = $region36
        $region35: #{tpu_custom_call.1} parent=31 // pred_region
          %170 = dma.done %s163, 1024
        $region36: #{tpu_custom_call.1} parent=31 // pred_fallthru
          _
        %s171 = sand.u32 %s28, 1
        %s172 = scalar_lea.sflag [#allocation3], %s171
        %s173 = sand.u32 %s28, 1
        %s174 = smul.addr %s173, 64
        %s175 = scalar_lea.vmem [#allocation2], %s174
        %p176 = pneg %p41
        %p177 = pneg %p38
        %p178 = pneg %p62
        %p179 = pneg %p59
        %p180 = pneg %p83
        %p181 = pneg %p80
        %p182 = pneg %p109
        %p183 = pneg %p106
        %s184 = sand.u32 %s96, 1
        %s185 = scalar_lea.sflag [#allocation4], %s184
        %s186 = sand.u32 %s96, 1
        %s187 = smul.addr %s186, 64
        %s188 = scalar_lea.vmem [#allocation5], %s187
        %v189 = vld [vmem:[%s1] sm:$0x3]
        %v190 = vld [vmem:[%s2] sm:$0xff]
        %v191 = vld [vmem:[%s2 + $0x8] sm:$0xff]
        %v192 = vld [vmem:[%s2 + $0x10] sm:$0xff]
        %v193 = vld [vmem:[%s2 + $0x18] sm:$0xff]
        %v194 = vld [vmem:[%s166] sm:$0xff]
        %v195 = vld [vmem:[%s166 + $0x8] sm:$0xff]
        %v196 = vld [vmem:[%s166 + $0x10] sm:$0xff]
        %v197 = vld [vmem:[%s166 + $0x18] sm:$0xff]
        %v198 = vld [vmem:[%s166 + $0x20] sm:$0xff]
        %v199 = vld [vmem:[%s166 + $0x28] sm:$0xff]
        %v200 = vld [vmem:[%s166 + $0x30] sm:$0xff]
        %v201 = vld [vmem:[%s166 + $0x38] sm:$0xff]
        %v202 = vadd.f32 %v194, %v195
        %203 = vadd.xlane.f32.xlu0 %v202
        %v204 = vpop.xlane.xlu0 %203
        %v205 = vadd.f32 %v196, %v197
        %206 = vadd.xlane.f32.xlu0 %v205
        %v207 = vpop.xlane.xlu0 %206
        %v208 = vadd.f32 %v198, %v199
        %209 = vadd.xlane.f32.xlu0 %v208
        %v210 = vpop.xlane.xlu0 %209
        %v211 = vadd.f32 %v200, %v201
        %212 = vadd.xlane.f32.xlu0 %v211
        %v213 = vpop.xlane.xlu0 %212
        %v214 = vmul.f32 %v204, 0.00390625
        %v215 = vmul.f32 %v207, 0.00390625
        %v216 = vmul.f32 %v210, 0.00390625
        %v217 = vmul.f32 %v213, 0.00390625
        %vm218 = vcmask 261120
        %v220 = vsel %vm218, %v189, 0
        %222 = vmatprep.subr.mxu0 0.0
        %223 = vmatpush1.msra.mxu0 %v214
        %224 = vmatprep.subr.mxu0 0.0
        %225 = vmatpush1.msra.mxu0 %v215
        %226 = vmatprep.subr.mxu0 0.0
        %227 = vmatpush1.msra.mxu0 %v216
        %228 = vmatprep.subr.mxu0 0.0
        %229 = vmatpush1.msra.mxu0 %v217
        %230 = vmatprep.subr.mxu0 0.0
        %231 = vmatpush1.msra.mxu0 0.0
        %232 = vmatprep.subr.mxu0 0.0
        %233 = vmatpush1.msra.mxu0 0.0
        %234 = vmatprep.subr.mxu0 0.0
        %235 = vmatpush1.msra.mxu0 0.0
        %236 = vmatprep.subr.mxu0 0.0
        %237 = vmatpush1.msra.mxu0 0.0
        %238 = vmatprep.subr.mxu0 0.0
        %239 = vmatpush1.msra.mxu0 0.0
        %240 = vmatprep.subr.mxu0 0.0
        %241 = vmatpush1.msra.mxu0 0.0
        %242 = vmatprep.subr.mxu0 0.0
        %243 = vmatpush1.msra.mxu0 0.0
        %244 = vmatprep.subr.mxu0 0.0
        %245 = vmatpush1.msra.mxu0 0.0
        %246 = vmatprep.subr.mxu0 0.0
        %247 = vmatpush1.msra.mxu0 0.0
        %248 = vmatprep.subr.mxu0 0.0
        %249 = vmatpush1.msra.mxu0 0.0
        %250 = vmatprep.subr.mxu0 0.0
        %251 = vmatpush1.msra.mxu0 0.0
        %252 = vmatprep.subr.mxu0 0.0
        %253 = vmatpush1.msra.mxu0 0.0
        %254 = vmatprep.subr.mxu0 0.0
        %255 = vmatpush1.msra.mxu0 0.0
        %256 = vmatprep.subr.mxu0 0.0
        %257 = vmatpush1.msra.mxu0 0.0
        %258 = vmatprep.subr.mxu0 0.0
        %259 = vmatpush1.msra.mxu0 0.0
        %260 = vmatprep.subr.mxu0 0.0
        %261 = vmatpush1.msra.mxu0 0.0
        %262 = vmatprep.subr.mxu0 0.0
        %263 = vmatpush1.msra.mxu0 0.0
        %264 = vmatprep.subr.mxu0 0.0
        %265 = vmatpush1.msra.mxu0 0.0
        %266 = vmatprep.subr.mxu0 0.0
        %267 = vmatpush1.msra.mxu0 0.0
        %268 = vmatprep.subr.mxu0 0.0
        %269 = vmatpush1.msra.mxu0 0.0
        %270 = vmatprep.subr.mxu0 0.0
        %271 = vmatpush1.msra.mxu0 0.0
        %272 = vmatprep.subr.mxu0 0.0
        %273 = vmatpush1.msra.mxu0 0.0
        %274 = vmatprep.subr.mxu0 0.0
        %275 = vmatpush1.msra.mxu0 0.0
        %276 = vmatprep.subr.mxu0 0.0
        %277 = vmatpush1.msra.mxu0 0.0
        %278 = vmatprep.subr.mxu0 0.0
        %279 = vmatpush1.msra.mxu0 0.0
        %280 = vmatprep.subr.mxu0 0.0
        %281 = vmatpush1.msra.mxu0 0.0
        %282 = vmatprep.subr.mxu0 0.0
        %283 = vmatpush1.msra.mxu0 0.0
        %284 = vmatprep.subr.mxu0 0.0
        %285 = vmatpush1.msra.mxu0 0.0
        %286 = vmatprep.mubr.f32.mxu0 0.0
        %287 = vmatmul.mubr.f32.gmra.mrb[0].mxu0 %v220
        %v288 = vpop.f32.mrb[0].mxu0
        %v289 = vadd.f32 0.0, %v288
        %v290 = vpop.f32.mrb[0].mxu0
        %291 = vdwg.mxu0
        %v292 = vmax.f32 %v289, 0.0
        %vm293 = vcmask 15360
        %v295 = vsel %vm293, %v190, 0
        %v298 = vsel %vm293, %v191, 0
        %v301 = vsel %vm293, %v192, 0
        %v304 = vsel %vm293, %v193, 0
        %vm306 = vcmask 1041408
        %v308 = vsel %vm306, %v292, 0
        %310 = vmatprep.subr.mxu0 0.0
        %311 = vmatpush1.msra.mxu0 %v308
        %312 = vmatprep.subr.mxu0 0.0
        %313 = vmatpush1.msra.mxu0 0.0
        %314 = vmatprep.subr.mxu0 0.0
        %315 = vmatpush1.msra.mxu0 0.0
        %316 = vmatprep.subr.mxu0 0.0
        %317 = vmatpush1.msra.mxu0 0.0
        %318 = vmatprep.subr.mxu0 0.0
        %319 = vmatpush1.msra.mxu0 0.0
        %320 = vmatprep.subr.mxu0 0.0
        %321 = vmatpush1.msra.mxu0 0.0
        %322 = vmatprep.subr.mxu0 0.0
        %323 = vmatpush1.msra.mxu0 0.0
        %324 = vmatprep.subr.mxu0 0.0
        %325 = vmatpush1.msra.mxu0 0.0
        %326 = vmatprep.subr.mxu0 0.0
        %327 = vmatpush1.msra.mxu0 0.0
        %328 = vmatprep.subr.mxu0 0.0
        %329 = vmatpush1.msra.mxu0 0.0
        %330 = vmatprep.subr.mxu0 0.0
        %331 = vmatpush1.msra.mxu0 0.0
        %332 = vmatprep.subr.mxu0 0.0
        %333 = vmatpush1.msra.mxu0 0.0
        %334 = vmatprep.subr.mxu0 0.0
        %335 = vmatpush1.msra.mxu0 0.0
        %336 = vmatprep.subr.mxu0 0.0
        %337 = vmatpush1.msra.mxu0 0.0
        %338 = vmatprep.subr.mxu0 0.0
        %339 = vmatpush1.msra.mxu0 0.0
        %340 = vmatprep.subr.mxu0 0.0
        %341 = vmatpush1.msra.mxu0 0.0
        %342 = vmatprep.subr.mxu0 0.0
        %343 = vmatpush1.msra.mxu0 0.0
        %344 = vmatprep.subr.mxu0 0.0
        %345 = vmatpush1.msra.mxu0 0.0
        %346 = vmatprep.subr.mxu0 0.0
        %347 = vmatpush1.msra.mxu0 0.0
        %348 = vmatprep.subr.mxu0 0.0
        %349 = vmatpush1.msra.mxu0 0.0
        %350 = vmatprep.subr.mxu0 0.0
        %351 = vmatpush1.msra.mxu0 0.0
        %352 = vmatprep.subr.mxu0 0.0
        %353 = vmatpush1.msra.mxu0 0.0
        %354 = vmatprep.subr.mxu0 0.0
        %355 = vmatpush1.msra.mxu0 0.0
        %356 = vmatprep.subr.mxu0 0.0
        %357 = vmatpush1.msra.mxu0 0.0
        %358 = vmatprep.subr.mxu0 0.0
        %359 = vmatpush1.msra.mxu0 0.0
        %360 = vmatprep.subr.mxu0 0.0
        %361 = vmatpush1.msra.mxu0 0.0
        %362 = vmatprep.subr.mxu0 0.0
        %363 = vmatpush1.msra.mxu0 0.0
        %364 = vmatprep.subr.mxu0 0.0
        %365 = vmatpush1.msra.mxu0 0.0
        %366 = vmatprep.subr.mxu0 0.0
        %367 = vmatpush1.msra.mxu0 0.0
        %368 = vmatprep.subr.mxu0 0.0
        %369 = vmatpush1.msra.mxu0 0.0
        %370 = vmatprep.subr.mxu0 0.0
        %371 = vmatpush1.msra.mxu0 0.0
        %372 = vmatprep.subr.mxu0 0.0
        %373 = vmatpush1.msra.mxu0 0.0
        %374 = vmatprep.mubr.f32.mxu0 0.0
        %375 = vmatmul.mubr.f32.gmra.mrb[0].mxu0 %v295
        %v376 = vpop.f32.mrb[0].mxu0
        %v377 = vadd.f32 0.0, %v376
        %v378 = vpop.f32.mrb[0].mxu0
        %379 = vmatprep.mubr.f32.mxu0 0.0
        %380 = vmatmul.mubr.f32.gmra.mrb[0].mxu0 %v298
        %v381 = vpop.f32.mrb[0].mxu0
        %v382 = vadd.f32 0.0, %v381
        %v383 = vpop.f32.mrb[0].mxu0
        %384 = vmatprep.mubr.f32.mxu0 0.0
        %385 = vmatmul.mubr.f32.gmra.mrb[0].mxu0 %v301
        %v386 = vpop.f32.mrb[0].mxu0
        %v387 = vadd.f32 0.0, %v386
        %v388 = vpop.f32.mrb[0].mxu0
        %389 = vmatprep.mubr.f32.mxu0 0.0
        %390 = vmatmul.mubr.f32.gmra.mrb[0].mxu0 %v304
        %v391 = vpop.f32.mrb[0].mxu0
        %v392 = vadd.f32 0.0, %v391
        %v393 = vpop.f32.mrb[0].mxu0
        %394 = vdwg.mxu0
        %v395 = vxor.u32 %v377, 2147483648
        %v396 = vxor.u32 %v382, 2147483648
        %v397 = vxor.u32 %v387, 2147483648
        %v398 = vxor.u32 %v392, 2147483648
        %v399 = vmul.f32 %v395, 1.442695
        %v400 = vpow.pop %v399
        %v401 = vmul.f32 %v396, 1.442695
        %v402 = vpow.pop %v401
        %v403 = vmul.f32 %v397, 1.442695
        %v404 = vpow.pop %v403
        %v405 = vmul.f32 %v398, 1.442695
        %v406 = vpow.pop %v405
        %v407 = vadd.f32 %v400, 1.0
        %v408 = vadd.f32 %v402, 1.0
        %v409 = vadd.f32 %v404, 1.0
        %v410 = vadd.f32 %v406, 1.0
        %v411 = vrcp.pop %v407
        %v412 = vmul.f32 1.0, %v411
        %v413 = vrcp.pop %v408
        %v414 = vmul.f32 1.0, %v413
        %v415 = vrcp.pop %v409
        %v416 = vmul.f32 1.0, %v415
        %v417 = vrcp.pop %v410
        %v418 = vmul.f32 1.0, %v417
        %420 = vset.pattern.permute.xlu0 0
        %421 = vperm.xlu0 %420, %v412
        %v422 = vpop.permute.xlu0 %421
        %425 = vset.pattern.permute.xlu0 0
        %426 = vperm.xlu0 %425, %v414
        %v427 = vpop.permute.xlu0 %426
        %430 = vset.pattern.permute.xlu0 0
        %431 = vperm.xlu0 %430, %v416
        %v432 = vpop.permute.xlu0 %431
        %435 = vset.pattern.permute.xlu0 0
        %436 = vperm.xlu0 %435, %v418
        %v437 = vpop.permute.xlu0 %436
        %v439 = vmul.f32 %v194, %v422
        %v440 = vmul.f32 %v195, %v422
        %v441 = vmul.f32 %v196, %v427
        %v442 = vmul.f32 %v197, %v427
        %v443 = vmul.f32 %v198, %v432
        %v444 = vmul.f32 %v199, %v432
        %v445 = vmul.f32 %v200, %v437
        %v446 = vmul.f32 %v201, %v437
        %447 = vst [vmem:[%s188] sm:$0xff] %v439
        %448 = vst [vmem:[%s188 + $0x8] sm:$0xff] %v440
        %449 = vst [vmem:[%s188 + $0x10] sm:$0xff] %v441
        %450 = vst [vmem:[%s188 + $0x18] sm:$0xff] %v442
        %451 = vst [vmem:[%s188 + $0x20] sm:$0xff] %v443
        %452 = vst [vmem:[%s188 + $0x28] sm:$0xff] %v444
        %453 = vst [vmem:[%s188 + $0x30] sm:$0xff] %v445
        %454 = vst [vmem:[%s188 + $0x38] sm:$0xff] %v446
        %s455 = sand.u32 %s96, 1
        %s456 = scalar_lea.sflag [#allocation4], %s455
        %s457 = sand.u32 %s96, 1
        %s458 = smul.addr %s457, 64
        %s459 = scalar_lea.vmem [#allocation5], %s458
        // Predicated region
        $region37: #{tpu_custom_call.1} parent=31 // pred_check
          %p460 = pneg %p106
        $region38: #{tpu_custom_call.1} parent=31 // pred_check_branch
          %462 = sbr.rel (%p460) target = $region40
        $region39: #{tpu_custom_call.1} parent=31 // pred_region
          %s464 = ssub.s32 1024, 1024
          %465 = vsyncadd %s456, %s464
          %s466 = smul.addr %s20, 8
          %s467 = smul.addr %s466, 128
          %s468 = scalar_lea.hbm %s3, %s467
          %s469 = sshll.u32 %s459, 4
          %s470 = int_to_ptr.vmem [resolvable:$true] %s469
          %475 = dma.vmem_to_hbm [thread:$0]  %s470, 1024, %s468, %s456, 256, 256, 16
        $region40: #{tpu_custom_call.1} parent=31 // pred_fallthru
          _
      $region32: #{tpu_custom_call.1} parent=5 // pred_fallthru
        _
      %p476 = scmp.le.s32.totalorder 2, %s15
      // Predicated region
      $region41: #{tpu_custom_call.1} parent=5 // pred_check
        %p477 = pneg %p476
      $region42: #{tpu_custom_call.1} parent=5 // pred_check_branch
        %479 = sbr.rel (%p477) target = $region44
      $region43: #{tpu_custom_call.1} parent=5 // pred_region
        %s480 = ssub.s32 %s15, 2
        // Predicated region
        $region45: #{tpu_custom_call.1} parent=43 // pred_check
          %p481 = pneg %p112
        $region46: #{tpu_custom_call.1} parent=43 // pred_check_branch
          %483 = sbr.rel (%p481) target = $region48
        $region47: #{tpu_custom_call.1} parent=43 // pred_region
          %s484 = sand.u32 %s97, 1
          %s485 = scalar_lea.sflag [#allocation4], %s484
          %s486 = sand.u32 %s97, 1
          %s487 = smul.addr %s486, 64
          %s488 = scalar_lea.vmem [#allocation5], %s487
          %489 = dma.done %s485, 1024
        $region48: #{tpu_custom_call.1} parent=43 // pred_fallthru
          _
      $region44: #{tpu_custom_call.1} parent=5 // pred_fallthru
        _
    $region6: #{tpu_custom_call.1} parent=1 // loop_footer
      %s19 = sadd.s32 1, %s15
    $region7: #{tpu_custom_call.1} parent=1 // loop_footer_branch
      %14 = sbr.rel target = $region3
    $region8: #{tpu_custom_call.1} parent=1 // loop_exit
      _
    %490 = vsyncpa [#allocation3], 1
    %s491 = scalar_lea.sflag [#allocation3], 1
    %492 = vsyncpa %s491, 1
    %493 = vsyncpa [#allocation4], 1
    %s494 = scalar_lea.sflag [#allocation4], 1
    %495 = vsyncpa %s494, 1

</llo_original>
